<compile_context>
chip_gen: v7x
topology: tpu7x:2x2x1
jax: 0.10.0
libtpu: 0.0.40
codegen_flags: <defaults>
</compile_context>

<pallas_src>
import jax
import jax.numpy as jnp
from jax.experimental import pallas as pl
from jax.experimental.pallas import tpu as pltpu


def _identity_kernel(x_ref, o_ref):
    # Whole forward of DifferentialOperator: identity (copy tile through VMEM).
    o_ref[...] = x_ref[...]


def _sublane_multiple(dtype) -> int:
    # f32 -> 8, bf16/f16 -> 16, int8/fp8 -> 32. 0 => unsupported (f64/complex).
    return {4: 8, 2: 16, 1: 32}.get(jnp.dtype(dtype).itemsize, 0)


# Wide, lane-dense last dims (multiples of 128) -> unmasked vst, low vld/vst pressure.
_WIDE_LANES = (32768, 16384, 8192, 4096, 2048, 1024, 512, 256, 128)


def _tile_params():
    """Generation-aware (tile_bytes, vmem_limit_bytes)."""
    try:
        vmem = int(pltpu.get_tpu_info().vmem_capacity_bytes)
    except Exception:  # pragma: no cover - conservative default (v7x-sized VMEM)
        vmem = 64 * 1024 * 1024
    if vmem >= 96 * 1024 * 1024:
        # v5e / v6e: 128 MiB VMEM -> big tiles, high limit.
        return 16 * 1024 * 1024, 100 * 1024 * 1024
    # v7x: 64 MiB VMEM per TC -> ~8 MiB tiles within a 48 MiB scoped limit
    # (2x double-buffered in + out = ~32 MiB live).
    return 8 * 1024 * 1024, 48 * 1024 * 1024


def _pallas_identity_copy(x: jax.Array) -> jax.Array:
    """Explicit Pallas HBM->VMEM->HBM copy implementing the identity forward."""
    dtype = x.dtype
    itemsize = jnp.dtype(dtype).itemsize
    total = x.size
    sub = _sublane_multiple(dtype)

    if total == 0 or sub == 0:
        # Empty or unsupported dtype (f64/complex): identity without a kernel.
        return x

    # Widest lane dim that exactly divides the flat size (no pad, no slice).
    lane = next((w for w in _WIDE_LANES if total % w == 0), None)
    if lane is None:
        # No 128-multiple divisor: forward is identity, so skip the copy
        # rather than paying pad + slice HBM traffic and losing alignment.
        return x

    rows = total // lane
    tile_bytes, vmem_limit = _tile_params()
    target_rows = max(sub, (tile_bytes // (lane * itemsize)) // sub * sub)

    if rows < sub:
        block_rows = rows                        # full row extent: always legal
    else:
        block_rows = min(target_rows, (rows // sub) * sub)
        # Keep >= 4 grid steps when the input is big enough so megacore
        # ("parallel" grid axis) has work for both TensorCores on v7x.
        quarter = ((rows // 4) // sub) * sub
        if quarter >= sub:
            block_rows = min(block_rows, quarter)
        block_rows = max(block_rows, sub)

    grid = (pl.cdiv(rows, block_rows),)
    x2d = x.reshape(rows, lane)

    out2d = pl.pallas_call(
        _identity_kernel,
        out_shape=jax.ShapeDtypeStruct((rows, lane), dtype),
        grid_spec=pltpu.PrefetchScalarGridSpec(
            num_scalar_prefetch=0,
            grid=grid,
            in_specs=[pl.BlockSpec((block_rows, lane), lambda i: (i, 0))],
            out_specs=pl.BlockSpec((block_rows, lane), lambda i: (i, 0)),
        ),
        compiler_params=pltpu.CompilerParams(
            dimension_semantics=("parallel",),
            vmem_limit_bytes=vmem_limit,
        ),
        cost_estimate=pl.CostEstimate(
            flops=0, transcendentals=0, bytes_accessed=2 * total * itemsize
        ),
    )(x2d)

    return out2d.reshape(x.shape)


def differential_operator_forward(x: jax.Array, *, materialize: bool = False) -> jax.Array:
    """DifferentialOperator.forward (identity map).

    Default path returns x directly: launching a kernel would only add 2x
    total-size HBM traffic writing identical data back.  Set materialize=True
    to run the Pallas copy kernel (fresh output buffer / subclass scaffold).
    """
    if not materialize:
        return x
    return _pallas_identity_copy(x)


# TODO(synk): subclasses (e.g. GradientOperator stacking x/y/z finite-difference
# maps) are not defined in the provided module, so only the base identity
# forward is implemented here.


if __name__ == "__main__":
    key = jax.random.PRNGKey(0)
    # Small NCHW input consistent with a conv-style differential operator.
    x = jax.random.normal(key, (2, 4, 16, 16), dtype=jnp.float32)

    # Production path: identity short-circuit (no kernel launch).
    y_fast = differential_operator_forward(x)

    # Exercise the Pallas kernel once (explicit materialized copy).
    y = differential_operator_forward(x, materialize=True)
    y = jax.block_until_ready(y)

    assert y.shape == x.shape and y.dtype == x.dtype
    assert bool(jnp.array_equal(y, x))
    assert bool(jnp.array_equal(y_fast, x))
    print("KERNEL_OK")
</pallas_src>

<mosaic_0001>
module attributes {stable_mosaic.version = 11 : i64} {
  func.func @_identity_kernel(%arg0: i32, %arg1: memref<1x2048xf32, #tpu.memory_space<vmem>>, %arg2: memref<1x2048xf32, #tpu.memory_space<vmem>>) attributes {dimension_semantics = [#tpu.dimension_semantics<parallel>], iteration_bounds = array<i64: 1>, scalar_prefetch = 0 : i64, scratch_operands = 0 : i64, tpu.core_type = #tpu.core_type<tc>, window_params = [{transform_indices = @transform_0, window_bounds = array<i64: 1, 2048>}, {transform_indices = @transform_1, window_bounds = array<i64: 1, 2048>}]} {
    %c0 = arith.constant 0 : index
    %c0_0 = arith.constant 0 : index
    %0 = vector.load %arg1[%c0, %c0_0] : memref<1x2048xf32, #tpu.memory_space<vmem>>, vector<1x2048xf32>
    %c0_1 = arith.constant 0 : index
    %c0_2 = arith.constant 0 : index
    %1 = vector.load %arg2[%c0_1, %c0_2] : memref<1x2048xf32, #tpu.memory_space<vmem>>, vector<1x2048xf32>
    tpu.vector_store %arg2[%c0_1, %c0_2], %0 {strides = array<i32>} : memref<1x2048xf32, #tpu.memory_space<vmem>>, vector<1x2048xf32>,
    return
  }
  func.func @transform_0(%arg0: i32) -> (i32, i32) {
    %c0_i32 = arith.constant 0 : i32
    %c0_i32_0 = arith.constant 0 : i32
    return %arg0, %c0_i32 : i32, i32
  }
  func.func @transform_1(%arg0: i32) -> (i32, i32) {
    %c0_i32 = arith.constant 0 : i32
    %c0_i32_0 = arith.constant 0 : i32
    return %arg0, %c0_i32 : i32, i32
  }
}

</mosaic_0001>

<llo_original>
// kernel: tpu_custom_call.1
$region0: #{tpu_custom_call.1}
  #allocation0 [shape = 'u32[]', space=smem, size = 0x4, offset = 0x4, fixed_abs, tag = 'smem constant byte address 0x4 - core index']
  #allocation1 [shape = 'u32[144,128]{1,0:T(1,128)}', space=vmem, size = 0x12000, scoped, tag = 'internal scratch']
  %s0 = inlined_call_operand.hbm [shape: f32[1,2048], index: 0, kind: input, shape index: {}]
  %s1 = inlined_call_operand.hbm [shape: f32[1,2048], index: 1, kind: output, shape index: {}]
  %s2 = sld [smem:[#allocation0]]
  $region18: #{tpu_custom_call.1} parent=0
    _
  %s4 = ssub.s32 1, %s2
  %s5 = scalar_select 0, %s4, %s2
  $region1: #{tpu_custom_call.1} parent=0
    #allocation2 [shape = 'u8[8192]{0}', space=vmem, size = 0x2000, scoped, tag = 'input window, operand 0, single buffered']
    #allocation3 [shape = 's32[1]{0}', space=sflag, size = 0x4, scoped, tag = 'scoped memory for tpu_custom_call.1']
    #allocation4 [shape = 's32[1]{0}', space=sflag, size = 0x4, scoped, tag = 'scoped memory for tpu_custom_call.1']
    #allocation5 [shape = 'u8[8192]{0}', space=vmem, size = 0x2000, scoped, tag = 'output window, operand 0, single buffered']
    %6 = vsyncpa [#allocation3], 0
    %7 = vsyncpa [#allocation4], 0
    // Predicated region
    $region2: #{tpu_custom_call.1} parent=1 // pred_check
      _
    $region3: #{tpu_custom_call.1} parent=1 // pred_check_branch
      %9 = sbr.rel (0) target = $region5
    $region4: #{tpu_custom_call.1} parent=1 // pred_region
      %s11 = ssub.s32 256, 256
      %12 = vsyncadd [#allocation3], %s11
      %s14 = sshll.u32 [#allocation2], 4
      %s15 = int_to_ptr.vmem [resolvable:$true] %s14
      %17 = dma.hbm_to_vmem [thread:$0]  %s0, 256, %s15, [#allocation3]
    $region5: #{tpu_custom_call.1} parent=1 // pred_fallthru
      _
    // Predicated region
    $region6: #{tpu_custom_call.1} parent=1 // pred_check
      _
    $region7: #{tpu_custom_call.1} parent=1 // pred_check_branch
      %19 = sbr.rel (0) target = $region9
    $region8: #{tpu_custom_call.1} parent=1 // pred_region
      %20 = dma.done [#allocation3], 256
    $region9: #{tpu_custom_call.1} parent=1 // pred_fallthru
      _
    %v21 = vld [vmem:[#allocation2] sm:$0xff]
    %v22 = vld [vmem:[#allocation2 + $0x8] sm:$0xff]
    %23 = vst [vmem:[#allocation5] sm:$0xff] %v21
    %24 = vst [vmem:[#allocation5 + $0x8] sm:$0xff] %v22
    // Predicated region
    $region10: #{tpu_custom_call.1} parent=1 // pred_check
      _
    $region11: #{tpu_custom_call.1} parent=1 // pred_check_branch
      %26 = sbr.rel (0) target = $region13
    $region12: #{tpu_custom_call.1} parent=1 // pred_region
      %s28 = ssub.s32 256, 256
      %29 = vsyncadd [#allocation4], %s28
      %s31 = sshll.u32 [#allocation5], 4
      %s32 = int_to_ptr.vmem [resolvable:$true] %s31
      %34 = dma.vmem_to_hbm [thread:$0]  %s32, 256, %s1, [#allocation4]
    $region13: #{tpu_custom_call.1} parent=1 // pred_fallthru
      _
    // Predicated region
    $region14: #{tpu_custom_call.1} parent=1 // pred_check
      _
    $region15: #{tpu_custom_call.1} parent=1 // pred_check_branch
      %36 = sbr.rel (0) target = $region17
    $region16: #{tpu_custom_call.1} parent=1 // pred_region
      %37 = dma.done [#allocation4], 256
    $region17: #{tpu_custom_call.1} parent=1 // pred_fallthru
      _
    %38 = vsyncpa [#allocation3], 1
    %39 = vsyncpa [#allocation4], 1

</llo_original>
